<compile_context>
chip_gen: v7x
topology: tpu7x:2x2x1
jax: 0.10.0
libtpu: 0.0.40
codegen_flags: <defaults>
</compile_context>

<pallas_src>
import jax
import jax.numpy as jnp
from jax import lax
from jax.experimental import pallas as pl
from jax.experimental.pallas import tpu as pltpu


_BLOCK_BYTES = 4 * 1024 * 1024        # ~4 MiB per activation block (any dtype)
_VMEM_LIMIT_BYTES = 48 * 1024 * 1024  # safe on v5e/v6e (128 MiB phys) and v7x (64 MiB)


def _frozen_bn_kernel(x_ref, p_ref, o_ref):
    """y = x * scale + shift, with per-row (n, c) scale/shift broadcast on lanes.

    x_ref: (TR, TL) tile of the (N*C, H*W) activation slab
    p_ref: (TR, 2) float32; column 0 = scale, column 1 = shift
    o_ref: (TR, TL) output tile (x.dtype)
    """
    scale = p_ref[:, 0:1]                       # (TR, 1) f32
    shift = p_ref[:, 1:2]                       # (TR, 1) f32
    y = x_ref[...].astype(jnp.float32) * scale + shift
    o_ref[...] = y.astype(o_ref.dtype)


@jax.jit
def frozen_batch_norm_2d(x, weight, bias, running_mean, running_var):
    """x: (N, C, H, W); params: (C,).  Returns y with FrozenBatchNorm2d semantics."""
    N, C, H, W = x.shape
    R, L = N * C, H * W
    itemsize = jnp.dtype(x.dtype).itemsize
    eps = jnp.float32(1e-5)

    # O(C) param math in float32 (PyTorch keeps the affine in f32).
    scale = weight.astype(jnp.float32) * lax.rsqrt(
        running_var.astype(jnp.float32) + eps)
    shift = bias.astype(jnp.float32) - running_mean.astype(jnp.float32) * scale
    # O(N*C) tiling: row r = n*C + c of the slab gets (scale[c], shift[c]).
    params = jnp.stack([jnp.tile(scale, (N,)), jnp.tile(shift, (N,))],
                       axis=-1)                                   # (R, 2) f32

    # Free, contiguous view: NCHW -> (N*C, H*W). Channels on sublanes, spatial on lanes.
    x2d = x.reshape(R, L)
    # TODO(synk): for tiny spatial maps (H*W < 128) a lane-dense padded layout would
    # avoid masked vst; not added here since the pad/unpad costs an extra HBM copy.

    # ---- dtype-aware, byte-based block sizing -------------------------------
    sub = 32 // itemsize                      # sublane unit: 8 f32 / 16 bf16 / 32 int8
    # Grow the lane tile first: take full rows whenever a row fits the budget.
    lane_budget = max(128, _BLOCK_BYTES // (sub * itemsize))
    if L <= lane_budget:
        TL = L                                # full-extent lane block (always legal)
    else:
        TL = (lane_budget // 128) * 128       # 128-multiple; ragged tail masked
    # Spend the remaining byte budget on rows (dtype-packing-unit multiples).
    row_budget = max(sub, (_BLOCK_BYTES // (TL * itemsize)) // sub * sub)
    TR = R if R <= row_budget else row_budget

    # Keep >=2 blocks along a "parallel" axis when possible (v7x has 2 TensorCores).
    if R <= TR and L <= TL and R > sub:
        half_rows = ((pl.cdiv(R, 2) + sub - 1) // sub) * sub
        if half_rows < R:
            TR = half_rows

    grid = (pl.cdiv(R, TR), pl.cdiv(L, TL))

    cost = pl.CostEstimate(
        flops=2 * R * L,
        transcendentals=0,
        bytes_accessed=2 * R * L * itemsize + R * 2 * 4,
    )

    out2d = pl.pallas_call(
        _frozen_bn_kernel,
        out_shape=jax.ShapeDtypeStruct((R, L), x.dtype),
        grid_spec=pltpu.PrefetchScalarGridSpec(
            num_scalar_prefetch=0,
            grid=grid,
            in_specs=[
                pl.BlockSpec((TR, TL), lambda i, j: (i, j)),
                pl.BlockSpec((TR, 2), lambda i, j: (i, 0)),
            ],
            out_specs=pl.BlockSpec((TR, TL), lambda i, j: (i, j)),
        ),
        compiler_params=pltpu.CompilerParams(
            dimension_semantics=("parallel", "parallel"),
            vmem_limit_bytes=_VMEM_LIMIT_BYTES),
        cost_estimate=cost,
    )(x2d, params)

    return out2d.reshape(N, C, H, W)


def _reference(x, weight, bias, running_mean, running_var):
    w = weight.reshape(1, -1, 1, 1)
    b = bias.reshape(1, -1, 1, 1)
    rv = running_var.reshape(1, -1, 1, 1)
    rm = running_mean.reshape(1, -1, 1, 1)
    eps = 1e-5
    scale = w * jax.lax.rsqrt(rv + eps)
    return x * scale + (b - rm * scale)


if __name__ == "__main__":
    key = jax.random.PRNGKey(0)
    k_x, k_w, k_b, k_m, k_v = jax.random.split(key, 5)

    # Shapes implied by the module: (N, C, H, W) activations, (C,) frozen buffers.
    N, C, H, W = 2, 4, 16, 16
    x = jax.random.normal(k_x, (N, C, H, W), dtype=jnp.float32)

    weight = jnp.ones((C,), jnp.float32) + 0.1 * jax.random.normal(k_w, (C,))
    bias = jnp.zeros((C,), jnp.float32) + 0.1 * jax.random.normal(k_b, (C,))
    running_mean = 0.1 * jax.random.normal(k_m, (C,))
    running_var = jnp.ones((C,), jnp.float32) + 0.05 * jnp.abs(
        jax.random.normal(k_v, (C,)))

    out = frozen_batch_norm_2d(x, weight, bias, running_mean, running_var)
    out = jax.block_until_ready(out)

    ref = _reference(x, weight, bias, running_mean, running_var)
    assert out.shape == (N, C, H, W)
    assert out.dtype == x.dtype
    assert jnp.allclose(out, ref, atol=1e-5, rtol=1e-5)

    # A second, ragged shape exercising multi-step (split-row) tiled grid paths.
    N2, C2, H2, W2 = 2, 24, 30, 30   # R=48 rows, L=900 lanes (not a 128 multiple)
    x2 = jax.random.normal(k_x, (N2, C2, H2, W2), dtype=jnp.float32)
    w2 = jnp.ones((C2,), jnp.float32) + 0.1 * jax.random.normal(k_w, (C2,))
    b2 = jnp.zeros((C2,), jnp.float32) + 0.1 * jax.random.normal(k_b, (C2,))
    m2 = 0.1 * jax.random.normal(k_m, (C2,))
    v2 = jnp.ones((C2,), jnp.float32) + 0.05 * jnp.abs(
        jax.random.normal(k_v, (C2,)))
    out2 = jax.block_until_ready(frozen_batch_norm_2d(x2, w2, b2, m2, v2))
    assert jnp.allclose(out2, _reference(x2, w2, b2, m2, v2), atol=1e-5, rtol=1e-5)

    print("KERNEL_OK")
</pallas_src>

<mosaic_0001>
module attributes {stable_mosaic.version = 11 : i64} {
  func.func @_frozen_bn_kernel(%arg0: i32, %arg1: i32, %arg2: memref<8x256xf32, #tpu.memory_space<vmem>>, %arg3: memref<8x2xf32, #tpu.memory_space<vmem>>, %arg4: memref<8x256xf32, #tpu.memory_space<vmem>>) attributes {dimension_semantics = [#tpu.dimension_semantics<parallel>, #tpu.dimension_semantics<parallel>], iteration_bounds = array<i64: 1, 1>, scalar_prefetch = 0 : i64, scratch_operands = 0 : i64, tpu.core_type = #tpu.core_type<tc>, window_params = [{transform_indices = @transform_0, window_bounds = array<i64: 8, 256>}, {transform_indices = @transform_1, window_bounds = array<i64: 8, 2>}, {transform_indices = @transform_2, window_bounds = array<i64: 8, 256>}]} {
    %c0 = arith.constant 0 : index
    %c0_0 = arith.constant 0 : index
    %0 = vector.load %arg3[%c0, %c0_0] : memref<8x2xf32, #tpu.memory_space<vmem>>, vector<8x1xf32>
    %c0_1 = arith.constant 0 : index
    %c1 = arith.constant 1 : index
    %1 = vector.load %arg3[%c0_1, %c1] : memref<8x2xf32, #tpu.memory_space<vmem>>, vector<8x1xf32>
    %c0_2 = arith.constant 0 : index
    %c0_3 = arith.constant 0 : index
    %2 = vector.load %arg2[%c0_2, %c0_3] : memref<8x256xf32, #tpu.memory_space<vmem>>, vector<8x256xf32>
    %3 = vector.broadcast %0 : vector<8x1xf32> to vector<8x256xf32>
    %4 = arith.mulf %2, %3 : vector<8x256xf32>
    %5 = vector.broadcast %1 : vector<8x1xf32> to vector<8x256xf32>
    %6 = arith.addf %4, %5 : vector<8x256xf32>
    %c0_4 = arith.constant 0 : index
    %c0_5 = arith.constant 0 : index
    %7 = vector.load %arg4[%c0_4, %c0_5] : memref<8x256xf32, #tpu.memory_space<vmem>>, vector<8x256xf32>
    tpu.vector_store %arg4[%c0_4, %c0_5], %6 {strides = array<i32>} : memref<8x256xf32, #tpu.memory_space<vmem>>, vector<8x256xf32>,
    return
  }
  func.func @transform_0(%arg0: i32, %arg1: i32) -> (i32, i32) {
    %c0_i32 = arith.constant 0 : i32
    return %arg0, %arg1 : i32, i32
  }
  func.func @transform_1(%arg0: i32, %arg1: i32) -> (i32, i32) {
    %c0_i32 = arith.constant 0 : i32
    %c0_i32_0 = arith.constant 0 : i32
    return %arg0, %c0_i32 : i32, i32
  }
  func.func @transform_2(%arg0: i32, %arg1: i32) -> (i32, i32) {
    %c0_i32 = arith.constant 0 : i32
    return %arg0, %arg1 : i32, i32
  }
}

</mosaic_0001>

<llo_original>
// kernel: tile.17
$region0: #{tile.17}
  #allocation0 [shape = 's32[1]{0}', space=sflag, size = 0x4, scoped, tag = 'scoped memory for tile.17']
  %s0 = inlined_call_operand.vmem [shape: f32[4], index: 0, kind: input, shape index: {}]
  %s1 = inlined_call_operand.vmem [shape: f32[2,4], index: 1, kind: output, shape index: {}]
  // Predicated region
  $region2: #{tile.17} parent=0 // pred_check
    _
  $region3: #{tile.17} parent=0 // pred_check_branch
    %3 = sbr.rel (0) target = $region5
  $region4: #{tile.17} parent=0 // pred_region
    _
  $region5: #{tile.17} parent=0 // pred_fallthru
    _
  %v4 = vld [vmem:[%s0] ss:$0 sm:$0xff]
  %5 = vst [vmem:[%s1] sm:$0x3] %v4

// kernel: tile.19
$region0: #{tile.19}
  %s0 = inlined_call_operand.vmem [shape: f32[2,4], index: 0, kind: input, shape index: {}]
  %s1 = inlined_call_operand.vmem [shape: f32[8,1], index: 1, kind: output, shape index: {}]
  $region1: #{tile.19} parent=0
    #allocation0 [shape = 'u8[4096]{0}', space=vmem, size = 0x1000, scoped, tag = 'scoped mem for output reshape']
    #allocation1 [shape = 'u8[4096]{0}', space=vmem, size = 0x1000, scoped, tag = 'scoped mem for input reshape']
    %s3 = sshllo.u32 0, 2
    %v4 = vld [vmem:[%s0] sm:%s3]
    %5 = vst [vmem:[#allocation1] sm:%s3] %v4
    %v6 = vld [vmem:[#allocation1] sm:$0x1]
    %vm7 = vcmask 31744
    %8 = vst.msk [vmem:[#allocation0] sm:$0x1] %vm7, %v6
    %s9 = scalar_lea.vmem [#allocation1], 1
    %v10 = vld [vmem:[%s9] sm:$0x1]
    %11 = vrot.lane.b32.xlu0 %v10, 4
    %v12 = vpop.permute.xlu0 %11
    %vm13 = vcmask 64544
    %14 = vst.msk [vmem:[#allocation0] sm:$0x1] %vm13, %v12
    %s16 = sshllo.u32 0, 1
    %v18 = vld [vmem:[#allocation0] sm:%s16]
    %s19 = sshllo.u32 0, 1
    %20 = vst [vmem:[%s1] sm:%s19] %v18

// kernel: frozen_batch_norm_2d.1
$region0: #{frozen_batch_norm_2d.1}
  #allocation0 [shape = 'u32[]', space=smem, size = 0x4, offset = 0x4, fixed_abs, tag = 'smem constant byte address 0x4 - core index']
  #allocation1 [shape = 'u32[144,128]{1,0:T(1,128)}', space=vmem, size = 0x12000, scoped, tag = 'internal scratch']
  %s0 = inlined_call_operand.vmem [shape: f32[8,256], index: 0, kind: input, shape index: {}]
  %s1 = inlined_call_operand.vmem [shape: f32[8,2], index: 1, kind: input, shape index: {}]
  %s2 = inlined_call_operand.vmem [shape: f32[8,256], index: 2, kind: output, shape index: {}]
  %s3 = sld [smem:[#allocation0]]
  $region18: #{frozen_batch_norm_2d.1} parent=0
    _
  %s5 = ssub.s32 1, %s3
  %s6 = scalar_select 0, %s5, %s3
  // Predicated region
  $region2: #{frozen_batch_norm_2d.1} parent=0 // pred_check
    _
  $region3: #{frozen_batch_norm_2d.1} parent=0 // pred_check_branch
    %8 = sbr.rel (0) target = $region5
  $region4: #{frozen_batch_norm_2d.1} parent=0 // pred_region
    _
  $region5: #{frozen_batch_norm_2d.1} parent=0 // pred_fallthru
    _
  // Predicated region
  $region6: #{frozen_batch_norm_2d.1} parent=0 // pred_check
    _
  $region7: #{frozen_batch_norm_2d.1} parent=0 // pred_check_branch
    %10 = sbr.rel (0) target = $region9
  $region8: #{frozen_batch_norm_2d.1} parent=0 // pred_region
    _
  $region9: #{frozen_batch_norm_2d.1} parent=0 // pred_fallthru
    _
  %v11 = vld [vmem:[%s1] sm:$0xff]
  %v12 = vld [vmem:[%s0] sm:$0xff]
  %v13 = vld [vmem:[%s0 + $0x8] sm:$0xff]
  %15 = vset.pattern.permute.xlu0 0
  %16 = vperm.xlu0 %15, %v11
  %v17 = vpop.permute.xlu0 %16
  %v19 = vmul.f32 %v12, %v17
  %v20 = vmul.f32 %v13, %v17
  %21 = vset.pattern.permute.xlu0 1
  %22 = vperm.xlu0 %21, %v11
  %v23 = vpop.permute.xlu0 %22
  %v25 = vadd.f32 %v19, %v23
  %v26 = vadd.f32 %v20, %v23
  %27 = vst [vmem:[%s2] sm:$0xff] %v25
  %28 = vst [vmem:[%s2 + $0x8] sm:$0xff] %v26
  // Predicated region
  $region10: #{frozen_batch_norm_2d.1} parent=0 // pred_check
    _
  $region11: #{frozen_batch_norm_2d.1} parent=0 // pred_check_branch
    %30 = sbr.rel (0) target = $region13
  $region12: #{frozen_batch_norm_2d.1} parent=0 // pred_region
    _
  $region13: #{frozen_batch_norm_2d.1} parent=0 // pred_fallthru
    _
  // Predicated region
  $region14: #{frozen_batch_norm_2d.1} parent=0 // pred_check
    _
  $region15: #{frozen_batch_norm_2d.1} parent=0 // pred_check_branch
    %32 = sbr.rel (0) target = $region17
  $region16: #{frozen_batch_norm_2d.1} parent=0 // pred_region
    _
  $region17: #{frozen_batch_norm_2d.1} parent=0 // pred_fallthru
    _

</llo_original>
